<compile_context>
chip_gen: v5e
topology: v5e:2x2
jax: 0.10.0
libtpu: 0.0.40
codegen_flags: <defaults>
</compile_context>

<pallas_src>
import jax
import jax.numpy as jnp
from jax.experimental import pallas as pl
from jax.experimental.pallas import tpu as pltpu

# lane-padded feature dims (100 -> 128, 200 -> 256, 10 -> 128); exact because
# pads are zero and ReLU(0) = 0.
_IN, _H1, _H2, _NO = 784, 128, 256, 128


def mlp_kernel(x_ref, w1_ref, b1_ref, w2_ref, b2_ref, w3_ref, b3_ref, o_ref):
    # x: (TB, 784) f32 | w1: (784,128) w2: (128,256) w3: (256,128) compute dtype
    # b1/b2/b3: (1, N) f32 | o: (TB, 128) f32
    cdt = w1_ref.dtype                       # MXU operand dtype (bf16 or f32)
    x = x_ref[...].astype(cdt)               # VPU cast, hidden under the x DMA

    h1 = jnp.dot(x, w1_ref[...], preferred_element_type=jnp.float32) + b1_ref[...]
    h1 = jnp.maximum(h1, 0.0)                # f32 bias add + ReLU

    h2 = jnp.dot(h1.astype(cdt), w2_ref[...],
                 preferred_element_type=jnp.float32) + b2_ref[...]
    h2 = jnp.maximum(h2, 0.0)

    h3 = jnp.dot(h2.astype(cdt), w3_ref[...],
                 preferred_element_type=jnp.float32) + b3_ref[...]
    o_ref[...] = h3.astype(o_ref.dtype)


def prepare_params(params, compute_dtype=jnp.bfloat16):
    """One-time padding + cast of the weights. Do NOT call per forward."""
    w1, b1, w2, b2, w3, b3 = params
    w1p = jnp.pad(w1, ((0, 0), (0, _H1 - 100))).astype(compute_dtype)
    b1p = jnp.pad(b1.reshape(1, -1), ((0, 0), (0, _H1 - 100))).astype(jnp.float32)
    w2p = jnp.pad(w2, ((0, _H1 - 100), (0, _H2 - 200))).astype(compute_dtype)
    b2p = jnp.pad(b2.reshape(1, -1), ((0, 0), (0, _H2 - 200))).astype(jnp.float32)
    w3p = jnp.pad(w3, ((0, _H2 - 200), (0, _NO - 10))).astype(compute_dtype)
    b3p = jnp.pad(b3.reshape(1, -1), ((0, 0), (0, _NO - 10))).astype(jnp.float32)
    return (w1p, b1p, w2p, b2p, w3p, b3p)


def model_8_forward(x, prepared_params):
    """x: (B, 1, 28, 28) or (B, 784) float32 (bf16 also accepted).
    prepared_params: output of prepare_params(). Returns (B, 10) float32."""
    B = x.shape[0]
    x2d = x.reshape(B, -1)                   # torch .view(B, -1)
    assert x2d.shape[1] == _IN

    w1p, b1p, w2p, b2p, w3p, b3p = prepared_params

    # Batch tile: cap at 512 (multiple of 128, keeps per-step overhead small at
    # big B while fitting every generation's default scoped VMEM). For B > 512
    # the last block may be partial; Pallas masks the ragged stores and the
    # garbage rows >= B are sliced off below.
    TB = 512 if B > 512 else B
    n_tiles = pl.cdiv(B, TB)

    x_itemsize = jnp.dtype(x2d.dtype).itemsize
    w_itemsize = jnp.dtype(w1p.dtype).itemsize
    flops = 2 * B * (_IN * _H1 + _H1 * _H2 + _H2 * _NO)
    bytes_accessed = (
        B * _IN * x_itemsize                                 # x (as stored)
        + (_IN * _H1 + _H1 * _H2 + _H2 * _NO) * w_itemsize   # weights
        + (_H1 + _H2 + _NO) * 4                              # biases (f32)
        + B * _NO * 4                                        # output (f32)
    )

    out = pl.pallas_call(
        mlp_kernel,
        out_shape=jax.ShapeDtypeStruct((B, _NO), jnp.float32),
        grid=(n_tiles,),
        in_specs=[
            pl.BlockSpec((TB, _IN), lambda i: (i, 0)),    # x: tiled over batch
            pl.BlockSpec((_IN, _H1), lambda i: (0, 0)),   # weights/biases:
            pl.BlockSpec((1, _H1), lambda i: (0, 0)),     #   constant block
            pl.BlockSpec((_H1, _H2), lambda i: (0, 0)),   #   index -> fetched
            pl.BlockSpec((1, _H2), lambda i: (0, 0)),     #   once, stay VMEM-
            pl.BlockSpec((_H2, _NO), lambda i: (0, 0)),   #   resident across
            pl.BlockSpec((1, _NO), lambda i: (0, 0)),     #   all grid steps
        ],
        out_specs=pl.BlockSpec((TB, _NO), lambda i: (i, 0)),
        compiler_params=pltpu.CompilerParams(
            dimension_semantics=("parallel",),            # megacore sharding
        ),
        cost_estimate=pl.CostEstimate(
            flops=flops, transcendentals=0, bytes_accessed=bytes_accessed),
    )(x2d, w1p, b1p, w2p, b2p, w3p, b3p)

    # drop the lane-padded output columns (and any ragged-tile rows)
    return out[:B, :10]


def init_params(key):
    """Deterministic init mimicking nn.Linear default (uniform +/- 1/sqrt(fan_in))."""
    def linear(key, fan_in, fan_out):
        kw, kb = jax.random.split(key)
        bound = 1.0 / jnp.sqrt(fan_in)
        # stored as (fan_in, fan_out) so the kernel does x @ w (= x @ W.T in torch)
        w = jax.random.uniform(kw, (fan_in, fan_out), jnp.float32, -bound, bound)
        b = jax.random.uniform(kb, (fan_out,), jnp.float32, -bound, bound)
        return w, b

    k1, k2, k3 = jax.random.split(key, 3)
    w1, b1 = linear(k1, 784, 100)
    w2, b2 = linear(k2, 100, 200)
    w3, b3 = linear(k3, 200, 10)
    return (w1, b1, w2, b2, w3, b3)


def reference_forward(x, params, compute_dtype=jnp.float32):
    """Pure-JAX reference of the PyTorch forward (mimics the kernel's operand cast)."""
    B = x.shape[0]
    w1, b1, w2, b2, w3, b3 = params
    cast = lambda a: a.astype(compute_dtype).astype(jnp.float32)
    v = cast(x.reshape(B, -1))
    v = jnp.maximum(v @ cast(w1) + b1, 0.0)
    v = jnp.maximum(cast(v) @ cast(w2) + b2, 0.0)
    v = cast(v) @ cast(w3) + b3
    return v


if __name__ == "__main__":
    key = jax.random.PRNGKey(0)
    k_params, k_x = jax.random.split(key)

    params = init_params(k_params)
    # small MNIST-like NCHW input
    x = jax.random.normal(k_x, (8, 1, 28, 28), jnp.float32)

    fwd = jax.jit(model_8_forward)

    # f32 MXU-operand path: matches the pure-JAX reference tightly
    prep_f32 = prepare_params(params, jnp.float32)
    out_f32 = jax.block_until_ready(fwd(x, prep_f32))
    ref_f32 = reference_forward(x, params, jnp.float32)
    assert out_f32.shape == (8, 10)
    assert jnp.allclose(out_f32, ref_f32, atol=1e-4, rtol=1e-4), "f32 mismatch vs reference"

    # default bf16 MXU-operand path (f32 accumulation): loose tolerance
    prep_bf16 = prepare_params(params)          # bf16 is the default
    out_bf16 = jax.block_until_ready(fwd(x, prep_bf16))
    ref_bf16 = reference_forward(x, params, jnp.bfloat16)
    assert out_bf16.shape == (8, 10)
    assert jnp.allclose(out_bf16, ref_bf16, atol=2e-2, rtol=2e-2), "bf16 mismatch vs reference"

    print("KERNEL_OK")
</pallas_src>

<mosaic_0001>
module attributes {stable_mosaic.version = 11 : i64} {
  func.func @mlp_kernel(%arg0: i32, %arg1: memref<8x784xf32, #tpu.memory_space<vmem>>, %arg2: memref<784x128xf32, #tpu.memory_space<vmem>>, %arg3: memref<1x128xf32, #tpu.memory_space<vmem>>, %arg4: memref<128x256xf32, #tpu.memory_space<vmem>>, %arg5: memref<1x256xf32, #tpu.memory_space<vmem>>, %arg6: memref<256x128xf32, #tpu.memory_space<vmem>>, %arg7: memref<1x128xf32, #tpu.memory_space<vmem>>, %arg8: memref<8x128xf32, #tpu.memory_space<vmem>>) attributes {dimension_semantics = [#tpu.dimension_semantics<parallel>], iteration_bounds = array<i64: 1>, scalar_prefetch = 0 : i64, scratch_operands = 0 : i64, tpu.core_type = #tpu.core_type<tc>, window_params = [{transform_indices = @transform_0, window_bounds = array<i64: 8, 784>}, {pipeline_mode = #tpu.pipeline_mode<synchronous>, transform_indices = @transform_1, window_bounds = array<i64: 784, 128>}, {pipeline_mode = #tpu.pipeline_mode<synchronous>, transform_indices = @transform_2, window_bounds = array<i64: 1, 128>}, {pipeline_mode = #tpu.pipeline_mode<synchronous>, transform_indices = @transform_3, window_bounds = array<i64: 128, 256>}, {pipeline_mode = #tpu.pipeline_mode<synchronous>, transform_indices = @transform_4, window_bounds = array<i64: 1, 256>}, {pipeline_mode = #tpu.pipeline_mode<synchronous>, transform_indices = @transform_5, window_bounds = array<i64: 256, 128>}, {pipeline_mode = #tpu.pipeline_mode<synchronous>, transform_indices = @transform_6, window_bounds = array<i64: 1, 128>}, {transform_indices = @transform_7, window_bounds = array<i64: 8, 128>}]} {
    %c0 = arith.constant 0 : index
    %c0_0 = arith.constant 0 : index
    %0 = vector.load %arg1[%c0, %c0_0] : memref<8x784xf32, #tpu.memory_space<vmem>>, vector<8x784xf32>
    %c0_1 = arith.constant 0 : index
    %c0_2 = arith.constant 0 : index
    %1 = vector.load %arg2[%c0_1, %c0_2] : memref<784x128xf32, #tpu.memory_space<vmem>>, vector<784x128xf32>
    %cst = arith.constant dense<0.000000e+00> : vector<8x128xf32>
    %2 = tpu.matmul %0, %1, %cst {dimension_numbers = #tpu.dot_dimension_numbers<[1], [0], [0], [1], [0, 0, 1, 1], [], []>} : vector<8x784xf32>, vector<784x128xf32>, vector<8x128xf32> -> vector<8x128xf32>
    %c0_3 = arith.constant 0 : index
    %c0_4 = arith.constant 0 : index
    %3 = vector.load %arg3[%c0_3, %c0_4] : memref<1x128xf32, #tpu.memory_space<vmem>>, vector<1x128xf32>
    %4 = vector.broadcast %3 : vector<1x128xf32> to vector<8x128xf32>
    %5 = arith.addf %2, %4 : vector<8x128xf32>
    %cst_5 = arith.constant 0.000000e+00 : f32
    %6 = vector.broadcast %cst_5 : f32 to vector<8x128xf32>
    %7 = arith.maximumf %5, %6 : vector<8x128xf32>
    %c0_6 = arith.constant 0 : index
    %c0_7 = arith.constant 0 : index
    %8 = vector.load %arg4[%c0_6, %c0_7] : memref<128x256xf32, #tpu.memory_space<vmem>>, vector<128x256xf32>
    %cst_8 = arith.constant dense<0.000000e+00> : vector<8x256xf32>
    %9 = tpu.matmul %7, %8, %cst_8 {dimension_numbers = #tpu.dot_dimension_numbers<[1], [0], [0], [1], [0, 0, 1, 1], [], []>} : vector<8x128xf32>, vector<128x256xf32>, vector<8x256xf32> -> vector<8x256xf32>
    %c0_9 = arith.constant 0 : index
    %c0_10 = arith.constant 0 : index
    %10 = vector.load %arg5[%c0_9, %c0_10] : memref<1x256xf32, #tpu.memory_space<vmem>>, vector<1x256xf32>
    %11 = vector.broadcast %10 : vector<1x256xf32> to vector<8x256xf32>
    %12 = arith.addf %9, %11 : vector<8x256xf32>
    %cst_11 = arith.constant 0.000000e+00 : f32
    %13 = vector.broadcast %cst_11 : f32 to vector<8x256xf32>
    %14 = arith.maximumf %12, %13 : vector<8x256xf32>
    %c0_12 = arith.constant 0 : index
    %c0_13 = arith.constant 0 : index
    %15 = vector.load %arg6[%c0_12, %c0_13] : memref<256x128xf32, #tpu.memory_space<vmem>>, vector<256x128xf32>
    %cst_14 = arith.constant dense<0.000000e+00> : vector<8x128xf32>
    %16 = tpu.matmul %14, %15, %cst_14 {dimension_numbers = #tpu.dot_dimension_numbers<[1], [0], [0], [1], [0, 0, 1, 1], [], []>} : vector<8x256xf32>, vector<256x128xf32>, vector<8x128xf32> -> vector<8x128xf32>
    %c0_15 = arith.constant 0 : index
    %c0_16 = arith.constant 0 : index
    %17 = vector.load %arg7[%c0_15, %c0_16] : memref<1x128xf32, #tpu.memory_space<vmem>>, vector<1x128xf32>
    %18 = vector.broadcast %17 : vector<1x128xf32> to vector<8x128xf32>
    %19 = arith.addf %16, %18 : vector<8x128xf32>
    %c0_17 = arith.constant 0 : index
    %c0_18 = arith.constant 0 : index
    %20 = vector.load %arg8[%c0_17, %c0_18] : memref<8x128xf32, #tpu.memory_space<vmem>>, vector<8x128xf32>
    tpu.vector_store %arg8[%c0_17, %c0_18], %19 {strides = array<i32>} : memref<8x128xf32, #tpu.memory_space<vmem>>, vector<8x128xf32>,
    return
  }
  func.func @transform_0(%arg0: i32) -> (i32, i32) {
    %c0_i32 = arith.constant 0 : i32
    %c0_i32_0 = arith.constant 0 : i32
    return %arg0, %c0_i32 : i32, i32
  }
  func.func @transform_1(%arg0: i32) -> (i32, i32) {
    %c0_i32 = arith.constant 0 : i32
    %c0_i32_0 = arith.constant 0 : i32
    %c0_i32_1 = arith.constant 0 : i32
    return %c0_i32, %c0_i32_0 : i32, i32
  }
  func.func @transform_2(%arg0: i32) -> (i32, i32) {
    %c0_i32 = arith.constant 0 : i32
    %c0_i32_0 = arith.constant 0 : i32
    %c0_i32_1 = arith.constant 0 : i32
    return %c0_i32, %c0_i32_0 : i32, i32
  }
  func.func @transform_3(%arg0: i32) -> (i32, i32) {
    %c0_i32 = arith.constant 0 : i32
    %c0_i32_0 = arith.constant 0 : i32
    %c0_i32_1 = arith.constant 0 : i32
    return %c0_i32, %c0_i32_0 : i32, i32
  }
  func.func @transform_4(%arg0: i32) -> (i32, i32) {
    %c0_i32 = arith.constant 0 : i32
    %c0_i32_0 = arith.constant 0 : i32
    %c0_i32_1 = arith.constant 0 : i32
    return %c0_i32, %c0_i32_0 : i32, i32
  }
  func.func @transform_5(%arg0: i32) -> (i32, i32) {
    %c0_i32 = arith.constant 0 : i32
    %c0_i32_0 = arith.constant 0 : i32
    %c0_i32_1 = arith.constant 0 : i32
    return %c0_i32, %c0_i32_0 : i32, i32
  }
  func.func @transform_6(%arg0: i32) -> (i32, i32) {
    %c0_i32 = arith.constant 0 : i32
    %c0_i32_0 = arith.constant 0 : i32
    %c0_i32_1 = arith.constant 0 : i32
    return %c0_i32, %c0_i32_0 : i32, i32
  }
  func.func @transform_7(%arg0: i32) -> (i32, i32) {
    %c0_i32 = arith.constant 0 : i32
    %c0_i32_0 = arith.constant 0 : i32
    return %arg0, %c0_i32 : i32, i32
  }
}

</mosaic_0001>

<llo_original>
// kernel: model_8_forward.1
$region0: #{model_8_forward.1}
  #allocation0 [shape = 'u32[]', space=smem, size = 0x4, offset = 0x4, fixed_abs, tag = 'smem constant byte address 0x4 - core index']
  #allocation1 [shape = 'u32[72,128]{1,0:T(1,128)}', space=vmem, size = 0x9000, scoped, tag = 'internal scratch']
  %s0 = inlined_call_operand.vmem [shape: f32[8,784], index: 0, kind: input, shape index: {}]
  %s1 = inlined_call_operand.vmem [shape: f32[784,128], index: 1, kind: input, shape index: {}]
  %s2 = inlined_call_operand.vmem [shape: f32[1,128], index: 2, kind: input, shape index: {}]
  %s3 = inlined_call_operand.hbm [shape: f32[128,256], index: 3, kind: input, shape index: {}]
  %s4 = inlined_call_operand.vmem [shape: f32[1,256], index: 4, kind: input, shape index: {}]
  %s5 = inlined_call_operand.hbm [shape: f32[256,128], index: 5, kind: input, shape index: {}]
  %s6 = inlined_call_operand.vmem [shape: f32[1,128], index: 6, kind: input, shape index: {}]
  %s7 = inlined_call_operand.hbm [shape: f32[8,128], index: 7, kind: output, shape index: {}]
  %s8 = sld [smem:[#allocation0]]
  $region46: #{model_8_forward.1} parent=0
    _
  %s10 = ssub.s32 1, %s8
  %s11 = scalar_select 0, %s10, %s8
  $region1: #{model_8_forward.1} parent=0
    #allocation2 [shape = 'u8[131072]{0}', space=vmem, size = 0x20000, scoped, tag = 'input window, operand 3, single buffered']
    #allocation3 [shape = 's32[1]{0}', space=sflag, size = 0x4, scoped, tag = 'scoped memory for model_8_forward.1']
    #allocation4 [shape = 's32[1]{0}', space=sflag, size = 0x4, scoped, tag = 'scoped memory for model_8_forward.1']
    #allocation5 [shape = 'u8[131072]{0}', space=vmem, size = 0x20000, scoped, tag = 'input window, operand 5, single buffered']
    #allocation6 [shape = 's32[1]{0}', space=sflag, size = 0x4, scoped, tag = 'scoped memory for model_8_forward.1']
    #allocation7 [shape = 'u8[4096]{0}', space=vmem, size = 0x1000, scoped, tag = 'output window, operand 0, single buffered']
    %12 = vsyncpa [#allocation3], 0
    %13 = vsyncpa [#allocation6], 0
    %14 = vsyncpa [#allocation4], 0
    // Predicated region
    $region2: #{model_8_forward.1} parent=1 // pred_check
      _
    $region3: #{model_8_forward.1} parent=1 // pred_check_branch
      %16 = sbr.rel (0) target = $region5
    $region4: #{model_8_forward.1} parent=1 // pred_region
      _
    $region5: #{model_8_forward.1} parent=1 // pred_fallthru
      _
    // Predicated region
    $region6: #{model_8_forward.1} parent=1 // pred_check
      _
    $region7: #{model_8_forward.1} parent=1 // pred_check_branch
      %18 = sbr.rel (0) target = $region9
    $region8: #{model_8_forward.1} parent=1 // pred_region
      _
    $region9: #{model_8_forward.1} parent=1 // pred_fallthru
      _
    // Predicated region
    $region10: #{model_8_forward.1} parent=1 // pred_check
      _
    $region11: #{model_8_forward.1} parent=1 // pred_check_branch
      %20 = sbr.rel (0) target = $region13
    $region12: #{model_8_forward.1} parent=1 // pred_region
      _
    $region13: #{model_8_forward.1} parent=1 // pred_fallthru
      _
    // Predicated region
    $region14: #{model_8_forward.1} parent=1 // pred_check
      _
    $region15: #{model_8_forward.1} parent=1 // pred_check_branch
      %22 = sbr.rel (0) target = $region17
    $region16: #{model_8_forward.1} parent=1 // pred_region
      %24 = vsyncadd [#allocation3], 0
      %s25 = sshll.u32 %s3, 4
      %s26 = int_to_ptr.hbm [resolvable:$true] %s25
      %s27 = sshll.u32 [#allocation2], 4
      %s28 = int_to_ptr.vmem [resolvable:$true] %s27
      %33 = dma.hbm_to_vmem [thread:$0]  %s26, 4096, %s28, [#allocation3], 256, 256, 16
    $region17: #{model_8_forward.1} parent=1 // pred_fallthru
      _
    // Predicated region
    $region18: #{model_8_forward.1} parent=1 // pred_check
      _
    $region19: #{model_8_forward.1} parent=1 // pred_check_branch
      %35 = sbr.rel (0) target = $region21
    $region20: #{model_8_forward.1} parent=1 // pred_region
      _
    $region21: #{model_8_forward.1} parent=1 // pred_fallthru
      _
    // Predicated region
    $region22: #{model_8_forward.1} parent=1 // pred_check
      _
    $region23: #{model_8_forward.1} parent=1 // pred_check_branch
      %37 = sbr.rel (0) target = $region25
    $region24: #{model_8_forward.1} parent=1 // pred_region
      %39 = vsyncadd [#allocation6], 0
      %s40 = sshll.u32 %s5, 4
      %s41 = int_to_ptr.hbm [resolvable:$true] %s40
      %s42 = sshll.u32 [#allocation5], 4
      %s43 = int_to_ptr.vmem [resolvable:$true] %s42
      %48 = dma.hbm_to_vmem [thread:$0]  %s41, 4096, %s43, [#allocation6], 128, 128, 8
    $region25: #{model_8_forward.1} parent=1 // pred_fallthru
      _
    // Predicated region
    $region26: #{model_8_forward.1} parent=1 // pred_check
      _
    $region27: #{model_8_forward.1} parent=1 // pred_check_branch
      %50 = sbr.rel (0) target = $region29
    $region28: #{model_8_forward.1} parent=1 // pred_region
      _
    $region29: #{model_8_forward.1} parent=1 // pred_fallthru
      _
    // Predicated region
    $region30: #{model_8_forward.1} parent=1 // pred_check
      _
    $region31: #{model_8_forward.1} parent=1 // pred_check_branch
      %52 = sbr.rel (0) target = $region33
    $region32: #{model_8_forward.1} parent=1 // pred_region
      %54 = dma.done [#allocation3], 4096
    $region33: #{model_8_forward.1} parent=1 // pred_fallthru
      _
    // Predicated region
    $region34: #{model_8_forward.1} parent=1 // pred_check
      _
    $region35: #{model_8_forward.1} parent=1 // pred_check_branch
      %56 = sbr.rel (0) target = $region37
    $region36: #{model_8_forward.1} parent=1 // pred_region
      %58 = dma.done [#allocation6], 4096
    $region37: #{model_8_forward.1} parent=1 // pred_fallthru
      _
    %v59 = vld [vmem:[%s0] sm:$0xff]
    %v60 = vld [vmem:[%s0 + $0x8] sm:$0xff]
    %v61 = vld [vmem:[%s0 + $0x10] sm:$0xff]
    %v62 = vld [vmem:[%s0 + $0x18] sm:$0xff]
    %v63 = vld [vmem:[%s0 + $0x20] sm:$0xff]
    %v64 = vld [vmem:[%s0 + $0x28] sm:$0xff]
    %v65 = vld [vmem:[%s0 + $0x30] sm:$0xff]
    %v66 = vld [vmem:[%s1] sm:$0xff]
    %v67 = vld [vmem:[%s1 + $0x8] sm:$0xff]
    %v68 = vld [vmem:[%s1 + $0x10] sm:$0xff]
    %v69 = vld [vmem:[%s1 + $0x18] sm:$0xff]
    %v70 = vld [vmem:[%s1 + $0x20] sm:$0xff]
    %v71 = vld [vmem:[%s1 + $0x28] sm:$0xff]
    %v72 = vld [vmem:[%s1 + $0x30] sm:$0xff]
    %v73 = vld [vmem:[%s1 + $0x38] sm:$0xff]
    %v74 = vld [vmem:[%s1 + $0x40] sm:$0xff]
    %v75 = vld [vmem:[%s1 + $0x48] sm:$0xff]
    %v76 = vld [vmem:[%s1 + $0x50] sm:$0xff]
    %v77 = vld [vmem:[%s1 + $0x58] sm:$0xff]
    %v78 = vld [vmem:[%s1 + $0x60] sm:$0xff]
    %v79 = vld [vmem:[%s1 + $0x68] sm:$0xff]
    %v80 = vld [vmem:[%s1 + $0x70] sm:$0xff]
    %v81 = vld [vmem:[%s1 + $0x78] sm:$0xff]
    %v82 = vld [vmem:[%s1 + $0x80] sm:$0xff]
    %v83 = vld [vmem:[%s1 + $0x88] sm:$0xff]
    %v84 = vld [vmem:[%s1 + $0x90] sm:$0xff]
    %v85 = vld [vmem:[%s1 + $0x98] sm:$0xff]
    %v86 = vld [vmem:[%s1 + $0xa0] sm:$0xff]
    %v87 = vld [vmem:[%s1 + $0xa8] sm:$0xff]
    %v88 = vld [vmem:[%s1 + $0xb0] sm:$0xff]
    %v89 = vld [vmem:[%s1 + $0xb8] sm:$0xff]
    %v90 = vld [vmem:[%s1 + $0xc0] sm:$0xff]
    %v91 = vld [vmem:[%s1 + $0xc8] sm:$0xff]
    %v92 = vld [vmem:[%s1 + $0xd0] sm:$0xff]
    %v93 = vld [vmem:[%s1 + $0xd8] sm:$0xff]
    %v94 = vld [vmem:[%s1 + $0xe0] sm:$0xff]
    %v95 = vld [vmem:[%s1 + $0xe8] sm:$0xff]
    %v96 = vld [vmem:[%s1 + $0xf0] sm:$0xff]
    %v97 = vld [vmem:[%s1 + $0xf8] sm:$0xff]
    %v98 = vld [vmem:[%s1 + $0x100] sm:$0xff]
    %v99 = vld [vmem:[%s1 + $0x108] sm:$0xff]
    %v100 = vld [vmem:[%s1 + $0x110] sm:$0xff]
    %v101 = vld [vmem:[%s1 + $0x118] sm:$0xff]
    %v102 = vld [vmem:[%s1 + $0x120] sm:$0xff]
    %v103 = vld [vmem:[%s1 + $0x128] sm:$0xff]
    %v104 = vld [vmem:[%s1 + $0x130] sm:$0xff]
    %v105 = vld [vmem:[%s1 + $0x138] sm:$0xff]
    %v106 = vld [vmem:[%s1 + $0x140] sm:$0xff]
    %v107 = vld [vmem:[%s1 + $0x148] sm:$0xff]
    %v108 = vld [vmem:[%s1 + $0x150] sm:$0xff]
    %v109 = vld [vmem:[%s1 + $0x158] sm:$0xff]
    %v110 = vld [vmem:[%s1 + $0x160] sm:$0xff]
    %v111 = vld [vmem:[%s1 + $0x168] sm:$0xff]
    %v112 = vld [vmem:[%s1 + $0x170] sm:$0xff]
    %v113 = vld [vmem:[%s1 + $0x178] sm:$0xff]
    %v114 = vld [vmem:[%s1 + $0x180] sm:$0xff]
    %v115 = vld [vmem:[%s1 + $0x188] sm:$0xff]
    %v116 = vld [vmem:[%s1 + $0x190] sm:$0xff]
    %v117 = vld [vmem:[%s1 + $0x198] sm:$0xff]
    %v118 = vld [vmem:[%s1 + $0x1a0] sm:$0xff]
    %v119 = vld [vmem:[%s1 + $0x1a8] sm:$0xff]
    %v120 = vld [vmem:[%s1 + $0x1b0] sm:$0xff]
    %v121 = vld [vmem:[%s1 + $0x1b8] sm:$0xff]
    %v122 = vld [vmem:[%s1 + $0x1c0] sm:$0xff]
    %v123 = vld [vmem:[%s1 + $0x1c8] sm:$0xff]
    %v124 = vld [vmem:[%s1 + $0x1d0] sm:$0xff]
    %v125 = vld [vmem:[%s1 + $0x1d8] sm:$0xff]
    %v126 = vld [vmem:[%s1 + $0x1e0] sm:$0xff]
    %v127 = vld [vmem:[%s1 + $0x1e8] sm:$0xff]
    %v128 = vld [vmem:[%s1 + $0x1f0] sm:$0xff]
    %v129 = vld [vmem:[%s1 + $0x1f8] sm:$0xff]
    %v130 = vld [vmem:[%s1 + $0x200] sm:$0xff]
    %v131 = vld [vmem:[%s1 + $0x208] sm:$0xff]
    %v132 = vld [vmem:[%s1 + $0x210] sm:$0xff]
    %v133 = vld [vmem:[%s1 + $0x218] sm:$0xff]
    %v134 = vld [vmem:[%s1 + $0x220] sm:$0xff]
    %v135 = vld [vmem:[%s1 + $0x228] sm:$0xff]
    %v136 = vld [vmem:[%s1 + $0x230] sm:$0xff]
    %v137 = vld [vmem:[%s1 + $0x238] sm:$0xff]
    %v138 = vld [vmem:[%s1 + $0x240] sm:$0xff]
    %v139 = vld [vmem:[%s1 + $0x248] sm:$0xff]
    %v140 = vld [vmem:[%s1 + $0x250] sm:$0xff]
    %v141 = vld [vmem:[%s1 + $0x258] sm:$0xff]
    %v142 = vld [vmem:[%s1 + $0x260] sm:$0xff]
    %v143 = vld [vmem:[%s1 + $0x268] sm:$0xff]
    %v144 = vld [vmem:[%s1 + $0x270] sm:$0xff]
    %v145 = vld [vmem:[%s1 + $0x278] sm:$0xff]
    %v146 = vld [vmem:[%s1 + $0x280] sm:$0xff]
    %v147 = vld [vmem:[%s1 + $0x288] sm:$0xff]
    %v148 = vld [vmem:[%s1 + $0x290] sm:$0xff]
    %v149 = vld [vmem:[%s1 + $0x298] sm:$0xff]
    %v150 = vld [vmem:[%s1 + $0x2a0] sm:$0xff]
    %v151 = vld [vmem:[%s1 + $0x2a8] sm:$0xff]
    %v152 = vld [vmem:[%s1 + $0x2b0] sm:$0xff]
    %v153 = vld [vmem:[%s1 + $0x2b8] sm:$0xff]
    %v154 = vld [vmem:[%s1 + $0x2c0] sm:$0xff]
    %v155 = vld [vmem:[%s1 + $0x2c8] sm:$0xff]
    %v156 = vld [vmem:[%s1 + $0x2d0] sm:$0xff]
    %v157 = vld [vmem:[%s1 + $0x2d8] sm:$0xff]
    %v158 = vld [vmem:[%s1 + $0x2e0] sm:$0xff]
    %v159 = vld [vmem:[%s1 + $0x2e8] sm:$0xff]
    %v160 = vld [vmem:[%s1 + $0x2f0] sm:$0xff]
    %v161 = vld [vmem:[%s1 + $0x2f8] sm:$0xff]
    %v162 = vld [vmem:[%s1 + $0x300] sm:$0xff]
    %v163 = vld [vmem:[%s1 + $0x308] sm:$0xff]
    %v164 = vld [vmem:[%s2] sm:$0x1]
    %v166 = vperm.slane %v164, 0
    %vm168 = vcmask 130048
    %v170 = vsel %vm168, %v65, 0
    %172 = vmatpush.msra.mxu0 %v81
    %173 = vmatpush.msra.mxu0 %v80
    %174 = vmatpush.msra.mxu0 %v79
    %175 = vmatpush.msra.mxu0 %v78
    %176 = vmatpush.msra.mxu0 %v77
    %177 = vmatpush.msra.mxu0 %v76
    %178 = vmatpush.msra.mxu0 %v75
    %179 = vmatpush.msra.mxu0 %v74
    %180 = vmatpush.msra.mxu0 %v73
    %181 = vmatpush.msra.mxu0 %v72
    %182 = vmatpush.msra.mxu0 %v71
    %183 = vmatpush.msra.mxu0 %v70
    %184 = vmatpush.msra.mxu0 %v69
    %185 = vmatpush.msra.mxu0 %v68
    %186 = vmatpush.msra.mxu0 %v67
    %187 = vmatpush.msra.mxu0 %v66
    %188 = vmatmul.f32.gmra.mxu0 %v59
    %v189 = vpop.f32.mrf.mxu0
    %v190 = vadd.f32 %v166, %v189
    %191 = vdwg.mxu0
    %192 = vmatpush.msra.mxu0 %v97
    %193 = vmatpush.msra.mxu0 %v96
    %194 = vmatpush.msra.mxu0 %v95
    %195 = vmatpush.msra.mxu0 %v94
    %196 = vmatpush.msra.mxu0 %v93
    %197 = vmatpush.msra.mxu0 %v92
    %198 = vmatpush.msra.mxu0 %v91
    %199 = vmatpush.msra.mxu0 %v90
    %200 = vmatpush.msra.mxu0 %v89
    %201 = vmatpush.msra.mxu0 %v88
    %202 = vmatpush.msra.mxu0 %v87
    %203 = vmatpush.msra.mxu0 %v86
    %204 = vmatpush.msra.mxu0 %v85
    %205 = vmatpush.msra.mxu0 %v84
    %206 = vmatpush.msra.mxu0 %v83
    %207 = vmatpush.msra.mxu0 %v82
    %208 = vmatmul.f32.gmra.mxu0 %v60
    %v209 = vpop.f32.mrf.mxu0
    %v210 = vadd.f32 %v190, %v209
    %211 = vdwg.mxu0
    %212 = vmatpush.msra.mxu0 %v113
    %213 = vmatpush.msra.mxu0 %v112
    %214 = vmatpush.msra.mxu0 %v111
    %215 = vmatpush.msra.mxu0 %v110
    %216 = vmatpush.msra.mxu0 %v109
    %217 = vmatpush.msra.mxu0 %v108
    %218 = vmatpush.msra.mxu0 %v107
    %219 = vmatpush.msra.mxu0 %v106
    %220 = vmatpush.msra.mxu0 %v105
    %221 = vmatpush.msra.mxu0 %v104
    %222 = vmatpush.msra.mxu0 %v103
    %223 = vmatpush.msra.mxu0 %v102
    %224 = vmatpush.msra.mxu0 %v101
    %225 = vmatpush.msra.mxu0 %v100
    %226 = vmatpush.msra.mxu0 %v99
    %227 = vmatpush.msra.mxu0 %v98
    %228 = vmatmul.f32.gmra.mxu0 %v61
    %v229 = vpop.f32.mrf.mxu0
    %v230 = vadd.f32 %v210, %v229
    %231 = vdwg.mxu0
    %232 = vmatpush.msra.mxu0 %v129
    %233 = vmatpush.msra.mxu0 %v128
    %234 = vmatpush.msra.mxu0 %v127
    %235 = vmatpush.msra.mxu0 %v126
    %236 = vmatpush.msra.mxu0 %v125
    %237 = vmatpush.msra.mxu0 %v124
    %238 = vmatpush.msra.mxu0 %v123
    %239 = vmatpush.msra.mxu0 %v122
    %240 = vmatpush.msra.mxu0 %v121
    %241 = vmatpush.msra.mxu0 %v120
    %242 = vmatpush.msra.mxu0 %v119
    %243 = vmatpush.msra.mxu0 %v118
    %244 = vmatpush.msra.mxu0 %v117
    %245 = vmatpush.msra.mxu0 %v116
    %246 = vmatpush.msra.mxu0 %v115
    %247 = vmatpush.msra.mxu0 %v114
    %248 = vmatmul.f32.gmra.mxu0 %v62
    %v249 = vpop.f32.mrf.mxu0
    %v250 = vadd.f32 %v230, %v249
    %251 = vdwg.mxu0
    %252 = vmatpush.msra.mxu0 %v145
    %253 = vmatpush.msra.mxu0 %v144
    %254 = vmatpush.msra.mxu0 %v143
    %255 = vmatpush.msra.mxu0 %v142
    %256 = vmatpush.msra.mxu0 %v141
    %257 = vmatpush.msra.mxu0 %v140
    %258 = vmatpush.msra.mxu0 %v139
    %259 = vmatpush.msra.mxu0 %v138
    %260 = vmatpush.msra.mxu0 %v137
    %261 = vmatpush.msra.mxu0 %v136
    %262 = vmatpush.msra.mxu0 %v135
    %263 = vmatpush.msra.mxu0 %v134
    %264 = vmatpush.msra.mxu0 %v133
    %265 = vmatpush.msra.mxu0 %v132
    %266 = vmatpush.msra.mxu0 %v131
    %267 = vmatpush.msra.mxu0 %v130
    %268 = vmatmul.f32.gmra.mxu0 %v63
    %v269 = vpop.f32.mrf.mxu0
    %v270 = vadd.f32 %v250, %v269
    %271 = vdwg.mxu0
    %272 = vmatpush.msra.mxu0 %v161
    %273 = vmatpush.msra.mxu0 %v160
    %274 = vmatpush.msra.mxu0 %v159
    %275 = vmatpush.msra.mxu0 %v158
    %276 = vmatpush.msra.mxu0 %v157
    %277 = vmatpush.msra.mxu0 %v156
    %278 = vmatpush.msra.mxu0 %v155
    %279 = vmatpush.msra.mxu0 %v154
    %280 = vmatpush.msra.mxu0 %v153
    %281 = vmatpush.msra.mxu0 %v152
    %282 = vmatpush.msra.mxu0 %v151
    %283 = vmatpush.msra.mxu0 %v150
    %284 = vmatpush.msra.mxu0 %v149
    %285 = vmatpush.msra.mxu0 %v148
    %286 = vmatpush.msra.mxu0 %v147
    %287 = vmatpush.msra.mxu0 %v146
    %288 = vmatmul.f32.gmra.mxu0 %v64
    %v289 = vpop.f32.mrf.mxu0
    %v290 = vadd.f32 %v270, %v289
    %291 = vdwg.mxu0
    %292 = vmatpush.msra.mxu0 0.0
    %293 = vmatpush.msra.mxu0 0.0
    %294 = vmatpush.msra.mxu0 0.0
    %295 = vmatpush.msra.mxu0 0.0
    %296 = vmatpush.msra.mxu0 0.0
    %297 = vmatpush.msra.mxu0 0.0
    %298 = vmatpush.msra.mxu0 0.0
    %299 = vmatpush.msra.mxu0 0.0
    %300 = vmatpush.msra.mxu0 0.0
    %301 = vmatpush.msra.mxu0 0.0
    %302 = vmatpush.msra.mxu0 0.0
    %303 = vmatpush.msra.mxu0 0.0
    %304 = vmatpush.msra.mxu0 0.0
    %305 = vmatpush.msra.mxu0 0.0
    %306 = vmatpush.msra.mxu0 %v163
    %307 = vmatpush.msra.mxu0 %v162
    %308 = vmatmul.f32.gmra.mxu0 %v170
    %v309 = vpop.f32.mrf.mxu0
    %v310 = vadd.f32 %v290, %v309
    %311 = vdwg.mxu0
    %v312 = vmax.f32 %v310, 0.0
    %v313 = vld [vmem:[#allocation2] sm:$0xff]
    %v314 = vld [vmem:[#allocation2 + $0x8] sm:$0xff]
    %v315 = vld [vmem:[#allocation2 + $0x10] sm:$0xff]
    %v316 = vld [vmem:[#allocation2 + $0x18] sm:$0xff]
    %v317 = vld [vmem:[#allocation2 + $0x20] sm:$0xff]
    %v318 = vld [vmem:[#allocation2 + $0x28] sm:$0xff]
    %v319 = vld [vmem:[#allocation2 + $0x30] sm:$0xff]
    %v320 = vld [vmem:[#allocation2 + $0x38] sm:$0xff]
    %v321 = vld [vmem:[#allocation2 + $0x40] sm:$0xff]
    %v322 = vld [vmem:[#allocation2 + $0x48] sm:$0xff]
    %v323 = vld [vmem:[#allocation2 + $0x50] sm:$0xff]
    %v324 = vld [vmem:[#allocation2 + $0x58] sm:$0xff]
    %v325 = vld [vmem:[#allocation2 + $0x60] sm:$0xff]
    %v326 = vld [vmem:[#allocation2 + $0x68] sm:$0xff]
    %v327 = vld [vmem:[#allocation2 + $0x70] sm:$0xff]
    %v328 = vld [vmem:[#allocation2 + $0x78] sm:$0xff]
    %v329 = vld [vmem:[#allocation2 + $0x80] sm:$0xff]
    %v330 = vld [vmem:[#allocation2 + $0x88] sm:$0xff]
    %v331 = vld [vmem:[#allocation2 + $0x90] sm:$0xff]
    %v332 = vld [vmem:[#allocation2 + $0x98] sm:$0xff]
    %v333 = vld [vmem:[#allocation2 + $0xa0] sm:$0xff]
    %v334 = vld [vmem:[#allocation2 + $0xa8] sm:$0xff]
    %v335 = vld [vmem:[#allocation2 + $0xb0] sm:$0xff]
    %v336 = vld [vmem:[#allocation2 + $0xb8] sm:$0xff]
    %v337 = vld [vmem:[#allocation2 + $0xc0] sm:$0xff]
    %v338 = vld [vmem:[#allocation2 + $0xc8] sm:$0xff]
    %v339 = vld [vmem:[#allocation2 + $0xd0] sm:$0xff]
    %v340 = vld [vmem:[#allocation2 + $0xd8] sm:$0xff]
    %v341 = vld [vmem:[#allocation2 + $0xe0] sm:$0xff]
    %v342 = vld [vmem:[#allocation2 + $0xe8] sm:$0xff]
    %v343 = vld [vmem:[#allocation2 + $0xf0] sm:$0xff]
    %v344 = vld [vmem:[#allocation2 + $0xf8] sm:$0xff]
    %v345 = vld [vmem:[%s4] sm:$0x3]
    %v347 = vperm.slane %v345, 0
    %v348 = vperm.slane %v345, 1
    %351 = vmatpush.msra.mxu0 %v343
    %352 = vmatpush.msra.mxu0 %v341
    %353 = vmatpush.msra.mxu0 %v339
    %354 = vmatpush.msra.mxu0 %v337
    %355 = vmatpush.msra.mxu0 %v335
    %356 = vmatpush.msra.mxu0 %v333
    %357 = vmatpush.msra.mxu0 %v331
    %358 = vmatpush.msra.mxu0 %v329
    %359 = vmatpush.msra.mxu0 %v327
    %360 = vmatpush.msra.mxu0 %v325
    %361 = vmatpush.msra.mxu0 %v323
    %362 = vmatpush.msra.mxu0 %v321
    %363 = vmatpush.msra.mxu0 %v319
    %364 = vmatpush.msra.mxu0 %v317
    %365 = vmatpush.msra.mxu0 %v315
    %366 = vmatpush.msra.mxu0 %v313
    %367 = vmatmul.f32.gmra.mxu0 %v312
    %v368 = vpop.f32.mrf.mxu0
    %v369 = vadd.f32 %v347, %v368
    %370 = vdwg.mxu0
    %371 = vmatpush.msra.mxu0 %v344
    %372 = vmatpush.msra.mxu0 %v342
    %373 = vmatpush.msra.mxu0 %v340
    %374 = vmatpush.msra.mxu0 %v338
    %375 = vmatpush.msra.mxu0 %v336
    %376 = vmatpush.msra.mxu0 %v334
    %377 = vmatpush.msra.mxu0 %v332
    %378 = vmatpush.msra.mxu0 %v330
    %379 = vmatpush.msra.mxu0 %v328
    %380 = vmatpush.msra.mxu0 %v326
    %381 = vmatpush.msra.mxu0 %v324
    %382 = vmatpush.msra.mxu0 %v322
    %383 = vmatpush.msra.mxu0 %v320
    %384 = vmatpush.msra.mxu0 %v318
    %385 = vmatpush.msra.mxu0 %v316
    %386 = vmatpush.msra.mxu0 %v314
    %387 = vmatmul.f32.gmra.mxu0 %v312
    %v388 = vpop.f32.mrf.mxu0
    %v389 = vadd.f32 %v348, %v388
    %390 = vdwg.mxu0
    %v391 = vmax.f32 %v369, 0.0
    %v392 = vmax.f32 %v389, 0.0
    %v393 = vld [vmem:[#allocation5] sm:$0xff]
    %v394 = vld [vmem:[#allocation5 + $0x8] sm:$0xff]
    %v395 = vld [vmem:[#allocation5 + $0x10] sm:$0xff]
    %v396 = vld [vmem:[#allocation5 + $0x18] sm:$0xff]
    %v397 = vld [vmem:[#allocation5 + $0x20] sm:$0xff]
    %v398 = vld [vmem:[#allocation5 + $0x28] sm:$0xff]
    %v399 = vld [vmem:[#allocation5 + $0x30] sm:$0xff]
    %v400 = vld [vmem:[#allocation5 + $0x38] sm:$0xff]
    %v401 = vld [vmem:[#allocation5 + $0x40] sm:$0xff]
    %v402 = vld [vmem:[#allocation5 + $0x48] sm:$0xff]
    %v403 = vld [vmem:[#allocation5 + $0x50] sm:$0xff]
    %v404 = vld [vmem:[#allocation5 + $0x58] sm:$0xff]
    %v405 = vld [vmem:[#allocation5 + $0x60] sm:$0xff]
    %v406 = vld [vmem:[#allocation5 + $0x68] sm:$0xff]
    %v407 = vld [vmem:[#allocation5 + $0x70] sm:$0xff]
    %v408 = vld [vmem:[#allocation5 + $0x78] sm:$0xff]
    %v409 = vld [vmem:[#allocation5 + $0x80] sm:$0xff]
    %v410 = vld [vmem:[#allocation5 + $0x88] sm:$0xff]
    %v411 = vld [vmem:[#allocation5 + $0x90] sm:$0xff]
    %v412 = vld [vmem:[#allocation5 + $0x98] sm:$0xff]
    %v413 = vld [vmem:[#allocation5 + $0xa0] sm:$0xff]
    %v414 = vld [vmem:[#allocation5 + $0xa8] sm:$0xff]
    %v415 = vld [vmem:[#allocation5 + $0xb0] sm:$0xff]
    %v416 = vld [vmem:[#allocation5 + $0xb8] sm:$0xff]
    %v417 = vld [vmem:[#allocation5 + $0xc0] sm:$0xff]
    %v418 = vld [vmem:[#allocation5 + $0xc8] sm:$0xff]
    %v419 = vld [vmem:[#allocation5 + $0xd0] sm:$0xff]
    %v420 = vld [vmem:[#allocation5 + $0xd8] sm:$0xff]
    %v421 = vld [vmem:[#allocation5 + $0xe0] sm:$0xff]
    %v422 = vld [vmem:[#allocation5 + $0xe8] sm:$0xff]
    %v423 = vld [vmem:[#allocation5 + $0xf0] sm:$0xff]
    %v424 = vld [vmem:[#allocation5 + $0xf8] sm:$0xff]
    %v425 = vld [vmem:[%s6] sm:$0x1]
    %v427 = vperm.slane %v425, 0
    %429 = vmatpush.msra.mxu0 %v408
    %430 = vmatpush.msra.mxu0 %v407
    %431 = vmatpush.msra.mxu0 %v406
    %432 = vmatpush.msra.mxu0 %v405
    %433 = vmatpush.msra.mxu0 %v404
    %434 = vmatpush.msra.mxu0 %v403
    %435 = vmatpush.msra.mxu0 %v402
    %436 = vmatpush.msra.mxu0 %v401
    %437 = vmatpush.msra.mxu0 %v400
    %438 = vmatpush.msra.mxu0 %v399
    %439 = vmatpush.msra.mxu0 %v398
    %440 = vmatpush.msra.mxu0 %v397
    %441 = vmatpush.msra.mxu0 %v396
    %442 = vmatpush.msra.mxu0 %v395
    %443 = vmatpush.msra.mxu0 %v394
    %444 = vmatpush.msra.mxu0 %v393
    %445 = vmatmul.f32.gmra.mxu0 %v391
    %v446 = vpop.f32.mrf.mxu0
    %v447 = vadd.f32 %v427, %v446
    %448 = vdwg.mxu0
    %449 = vmatpush.msra.mxu0 %v424
    %450 = vmatpush.msra.mxu0 %v423
    %451 = vmatpush.msra.mxu0 %v422
    %452 = vmatpush.msra.mxu0 %v421
    %453 = vmatpush.msra.mxu0 %v420
    %454 = vmatpush.msra.mxu0 %v419
    %455 = vmatpush.msra.mxu0 %v418
    %456 = vmatpush.msra.mxu0 %v417
    %457 = vmatpush.msra.mxu0 %v416
    %458 = vmatpush.msra.mxu0 %v415
    %459 = vmatpush.msra.mxu0 %v414
    %460 = vmatpush.msra.mxu0 %v413
    %461 = vmatpush.msra.mxu0 %v412
    %462 = vmatpush.msra.mxu0 %v411
    %463 = vmatpush.msra.mxu0 %v410
    %464 = vmatpush.msra.mxu0 %v409
    %465 = vmatmul.f32.gmra.mxu0 %v392
    %v466 = vpop.f32.mrf.mxu0
    %v467 = vadd.f32 %v447, %v466
    %468 = vdwg.mxu0
    %469 = vst [vmem:[#allocation7] sm:$0xff] %v467
    // Predicated region
    $region38: #{model_8_forward.1} parent=1 // pred_check
      _
    $region39: #{model_8_forward.1} parent=1 // pred_check_branch
      %471 = sbr.rel (0) target = $region41
    $region40: #{model_8_forward.1} parent=1 // pred_region
      %473 = vsyncadd [#allocation4], 0
      %s475 = sshll.u32 [#allocation7], 4
      %s476 = int_to_ptr.vmem [resolvable:$true] %s475
      %s477 = sshll.u32 %s7, 4
      %s478 = int_to_ptr.hbm [resolvable:$true] %s477
      %480 = dma.vmem_to_hbm [thread:$0]  %s476, 128, %s478, [#allocation4]
    $region41: #{model_8_forward.1} parent=1 // pred_fallthru
      _
    // Predicated region
    $region42: #{model_8_forward.1} parent=1 // pred_check
      _
    $region43: #{model_8_forward.1} parent=1 // pred_check_branch
      %482 = sbr.rel (0) target = $region45
    $region44: #{model_8_forward.1} parent=1 // pred_region
      %484 = dma.done [#allocation4], 128
    $region45: #{model_8_forward.1} parent=1 // pred_fallthru
      _
    %485 = vsyncpa [#allocation3], 1
    %486 = vsyncpa [#allocation6], 1
    %487 = vsyncpa [#allocation4], 1

</llo_original>
